<compile_context>
chip_gen: v6e
topology: v6e:2x2x1
jax: 0.10.0
libtpu: 0.0.40
codegen_flags: <defaults>
</compile_context>

<pallas_src>
import jax
import jax.numpy as jnp
from jax.experimental import pallas as pl
from jax.experimental.pallas import tpu as pltpu

LANE = 128
SUBLANE = 8


def _round_up(x, m):
    return (x + m - 1) // m * m


# ---------------------------------------------------------------------------
# Fused encoder kernel.  Grid = (B, S // ts); per (b, s):
#   feat  = ReLU(patches[b, s] @ Wc + bc)        [ts, Hp]   (MXU bf16 -> f32)
#   acc  += sum(feat, axis=0)                    [1, Hp]    (XLU reduce)
# on the last spatial tile of each batch:
#   out[b] = (acc / S) @ Wp + bp                 [1, Lp]    (MXU, f32)
# ---------------------------------------------------------------------------
def _make_encoder_kernel(inv_s):
    def kernel(patches_ref, wconv_ref, bconv_ref, wproj_ref, bproj_ref,
               out_ref, acc_ref):
        s = pl.program_id(1)

        @pl.when(s == 0)
        def _():
            acc_ref[...] = jnp.zeros_like(acc_ref)

        # conv-as-GEMM: [ts, Kp](bf16) @ [Kp, Hp](bf16) with f32 accumulation.
        feat = jnp.dot(patches_ref[...], wconv_ref[...],
                       preferred_element_type=jnp.float32)
        feat = jnp.maximum(feat + bconv_ref[...], 0.0)          # bias + ReLU (f32 VPU)

        # partial global-average-pool: spatial sum of this tile.
        acc_ref[...] += jnp.sum(feat, axis=0, keepdims=True)    # [1, Hp]

        @pl.when(s == pl.num_programs(1) - 1)
        def _():
            pooled = acc_ref[...] * inv_s                       # mean over true S
            out_ref[...] = (jnp.dot(pooled, wproj_ref[...],
                                    preferred_element_type=jnp.float32)
                            + bproj_ref[...])

    return kernel


def fused_encode(patches_bf16, wconv, bconv, wproj, bproj, *, spatial_size):
    """patches_bf16: [B, S, Kp] bf16; wconv: [Kp, Hp] bf16; bconv: [1, Hp] f32;
       wproj: [Hp, Lp] f32; bproj: [1, Lp] f32  ->  [B, Lp] f32."""
    B, S, Kp = patches_bf16.shape
    _, Hp = wconv.shape
    _, Lp = wproj.shape

    # Spatial tile: largest divisor of S (multiple of 8) whose double-buffered
    # bf16 patch stream stays within ~4 MiB/buffer -> safe even on v7x (64 MiB
    # physical VMEM, 32 MiB default scoped limit).
    ts_cap = max(SUBLANE, (4 << 20) // (Kp * 2))
    ts = S  # fallback: whole spatial extent (block == full dim is always legal)
    for cand in (1024, 512, 256, 128, 64, 32, 16, 8):
        if cand <= min(S, ts_cap) and S % cand == 0:
            ts = cand
            break
    ns = S // ts

    kernel = _make_encoder_kernel(1.0 / float(spatial_size))

    needed = (2 * ts * Kp * 2              # double-buffered patch tiles (bf16)
              + Kp * Hp * 2                # resident conv weight (bf16)
              + Hp * 4                     # resident conv bias (f32)
              + Hp * Lp * 4 + Lp * 4       # resident projection weight/bias
              + 2 * Lp * 4                 # output tile (double buffered)
              + Hp * 4)                    # f32 accumulator scratch
    vmem_limit = min(32 << 20, max(4 << 20, _round_up(needed * 2, 1 << 20)))

    cost = pl.CostEstimate(
        flops=2 * B * S * Kp * Hp + 2 * B * Hp * Lp,
        transcendentals=0,
        bytes_accessed=(B * S * Kp * 2 + Kp * Hp * 2 + Hp * 4
                        + Hp * Lp * 4 + Lp * 4 + B * Lp * 4),
    )

    out = pl.pallas_call(
        kernel,
        out_shape=jax.ShapeDtypeStruct((B, 1, Lp), jnp.float32),
        grid_spec=pltpu.PrefetchScalarGridSpec(
            num_scalar_prefetch=0,
            grid=(B, ns),
            in_specs=[
                # streamed patch tiles: [ts, Kp] per step
                pl.BlockSpec((None, ts, Kp), lambda b, s: (b, s, 0)),
                # weights / biases: VMEM-resident across the whole grid
                pl.BlockSpec((Kp, Hp), lambda b, s: (0, 0)),
                pl.BlockSpec((1, Hp), lambda b, s: (0, 0)),
                pl.BlockSpec((Hp, Lp), lambda b, s: (0, 0)),
                pl.BlockSpec((1, Lp), lambda b, s: (0, 0)),
            ],
            # lane-dense output (Lp = multiple of 128), revisited across s
            out_specs=pl.BlockSpec((None, 1, Lp), lambda b, s: (b, 0, 0)),
            scratch_shapes=[pltpu.VMEM((1, Hp), jnp.float32)],
        ),
        compiler_params=pltpu.CompilerParams(
            dimension_semantics=("parallel", "arbitrary"),
            vmem_limit_bytes=vmem_limit,
        ),
        cost_estimate=cost,
    )(patches_bf16, wconv, bconv, wproj, bproj)

    return out.reshape(B, Lp)


# ---------------------------------------------------------------------------
# Plain-JAX glue: lane-contiguous im2col for a 3x3 / stride-1 / pad-1 conv.
# Single NCHW->NHWC transpose, then 9 shifted views concatenated along the
# channel (lane) axis; patch flattening order is [kh, kw, c].
# TODO(synk): for real encoder sizes, replace with shift-accumulate inside the
# kernel (pltpu.roll / sliced reads) to avoid materializing 9x input in HBM.
# ---------------------------------------------------------------------------
def im2col_3x3(x_nchw, k_pad):
    B, C, H, W = x_nchw.shape
    x = jnp.transpose(x_nchw, (0, 2, 3, 1))                      # NHWC
    xp = jnp.pad(x, ((0, 0), (1, 1), (1, 1), (0, 0)))
    views = [xp[:, di:di + H, dj:dj + W, :]
             for di in range(3) for dj in range(3)]
    patches = jnp.concatenate(views, axis=-1)                    # [B, H, W, 9*C]
    patches = patches.reshape(B, H * W, 9 * C)
    if k_pad > 9 * C:
        patches = jnp.pad(patches, ((0, 0), (0, 0), (0, k_pad - 9 * C)))
    return patches                                               # [B, S, Kp]


# ---------------------------------------------------------------------------
# Full forward: TracedWrapper(model)(x) == model.encode(x)
# ---------------------------------------------------------------------------
def traced_wrapper_forward(x_nchw, params):
    w_conv, b_conv, w_proj, b_proj = params
    B, C, H, W = x_nchw.shape
    S = H * W
    K = 9 * C
    HID = w_conv.shape[1]
    LAT = w_proj.shape[1]

    Kp = _round_up(max(K, LANE), LANE)
    Hp = _round_up(max(HID, LANE), LANE)
    Lp = _round_up(max(LAT, LANE), LANE)

    patches = im2col_3x3(x_nchw, Kp)                             # [B, S, Kp] f32
    patches_bf = patches.astype(jnp.bfloat16)                    # bf16 MXU stream

    wconv_p = jnp.pad(w_conv, ((0, Kp - K), (0, Hp - HID))).astype(jnp.bfloat16)
    bconv_p = jnp.pad(b_conv, ((0, 0), (0, Hp - HID)))           # f32
    wproj_p = jnp.pad(w_proj, ((0, Hp - HID), (0, Lp - LAT)))    # f32
    bproj_p = jnp.pad(b_proj, ((0, 0), (0, Lp - LAT)))           # f32

    z = fused_encode(patches_bf, wconv_p, bconv_p, wproj_p, bproj_p,
                     spatial_size=S)                             # [B, Lp]
    return z[:, :LAT]


def make_params(key, c_in, hidden, latent):
    k1, k2, k3, k4 = jax.random.split(key, 4)
    w_conv = jax.random.normal(k1, (c_in * 9, hidden), jnp.float32) * 0.05
    b_conv = jax.random.normal(k2, (1, hidden), jnp.float32) * 0.01
    w_proj = jax.random.normal(k3, (hidden, latent), jnp.float32) * 0.05
    b_proj = jax.random.normal(k4, (1, latent), jnp.float32) * 0.01
    return w_conv, b_conv, w_proj, b_proj


if __name__ == "__main__":
    B, C, H, W = 2, 4, 16, 16
    HIDDEN, LATENT = 32, 16

    key = jax.random.PRNGKey(0)
    kx, kp = jax.random.split(key)
    x = jax.random.normal(kx, (B, C, H, W), jnp.float32)
    params = make_params(kp, C, HIDDEN, LATENT)

    fwd = jax.jit(traced_wrapper_forward)
    out = jax.block_until_ready(fwd(x, params))

    # pure-JAX reference mirroring the kernel's bf16-operand / f32-accumulate
    # numerics (bf16*bf16 products are exact in f32, so this matches the MXU).
    w_conv, b_conv, w_proj, b_proj = params
    K = 9 * C
    Kp = _round_up(max(K, LANE), LANE)
    patches = im2col_3x3(x, Kp)
    pb = patches.astype(jnp.bfloat16).astype(jnp.float32)
    wb = jnp.pad(w_conv, ((0, Kp - K), (0, 0))).astype(jnp.bfloat16).astype(jnp.float32)
    feat = jnp.maximum(
        jnp.einsum("bsk,kh->bsh", pb, wb,
                   precision=jax.lax.Precision.HIGHEST) + b_conv, 0.0)
    pooled = jnp.mean(feat, axis=1)
    ref = jnp.dot(pooled, w_proj, precision=jax.lax.Precision.HIGHEST) + b_proj

    assert out.shape == (B, LATENT)
    assert jnp.allclose(out, ref, atol=1e-4, rtol=1e-4), float(
        jnp.max(jnp.abs(out - ref)))
    print("KERNEL_OK")
</pallas_src>

<mosaic_0001>
module attributes {stable_mosaic.version = 11 : i64} {
  func.func @kernel(%arg0: i32, %arg1: i32, %arg2: memref<1x256x128xbf16, #tpu.memory_space<vmem>>, %arg3: memref<128x128xbf16, #tpu.memory_space<vmem>>, %arg4: memref<1x128xf32, #tpu.memory_space<vmem>>, %arg5: memref<128x128xf32, #tpu.memory_space<vmem>>, %arg6: memref<1x128xf32, #tpu.memory_space<vmem>>, %arg7: memref<1x1x128xf32, #tpu.memory_space<vmem>>, %arg8: memref<1x128xf32, #tpu.memory_space<vmem>>) attributes {dimension_semantics = [#tpu.dimension_semantics<parallel>, #tpu.dimension_semantics<arbitrary>], iteration_bounds = array<i64: 2, 1>, scalar_prefetch = 0 : i64, scratch_operands = 1 : i64, tpu.core_type = #tpu.core_type<tc>, window_params = [{transform_indices = @transform_0, window_bounds = array<i64: 1, 256, 128>}, {pipeline_mode = #tpu.pipeline_mode<synchronous>, transform_indices = @transform_1, window_bounds = array<i64: 128, 128>}, {pipeline_mode = #tpu.pipeline_mode<synchronous>, transform_indices = @transform_2, window_bounds = array<i64: 1, 128>}, {pipeline_mode = #tpu.pipeline_mode<synchronous>, transform_indices = @transform_3, window_bounds = array<i64: 128, 128>}, {pipeline_mode = #tpu.pipeline_mode<synchronous>, transform_indices = @transform_4, window_bounds = array<i64: 1, 128>}, {transform_indices = @transform_5, window_bounds = array<i64: 1, 1, 128>}]} {
    %c0_i32 = arith.constant 0 : i32
    %0 = arith.cmpi eq, %arg1, %c0_i32 : i32
    %1 = arith.extui %0 : i1 to i32
    %c0_i32_0 = arith.constant 0 : i32
    %2 = arith.cmpi ne, %1, %c0_i32_0 : i32
    scf.if %2 {
      %cst_15 = arith.constant 0.000000e+00 : f32
      %20 = vector.broadcast %cst_15 : f32 to vector<1x128xf32>
      %c0_16 = arith.constant 0 : index
      %c0_17 = arith.constant 0 : index
      %21 = vector.load %arg8[%c0_16, %c0_17] : memref<1x128xf32, #tpu.memory_space<vmem>>, vector<1x128xf32>
      tpu.vector_store %arg8[%c0_16, %c0_17], %20 {strides = array<i32>} : memref<1x128xf32, #tpu.memory_space<vmem>>, vector<1x128xf32>,
    } else {
    }
    %c0 = arith.constant 0 : index
    %c0_1 = arith.constant 0 : index
    %c0_2 = arith.constant 0 : index
    %3 = vector.load %arg2[%c0, %c0_1, %c0_2] : memref<1x256x128xbf16, #tpu.memory_space<vmem>>, vector<1x256x128xbf16>
    %4 = vector.shape_cast %3 : vector<1x256x128xbf16> to vector<256x128xbf16>
    %c0_3 = arith.constant 0 : index
    %c0_4 = arith.constant 0 : index
    %5 = vector.load %arg3[%c0_3, %c0_4] : memref<128x128xbf16, #tpu.memory_space<vmem>>, vector<128x128xbf16>
    %cst = arith.constant dense<0.000000e+00> : vector<256x128xf32>
    %6 = tpu.matmul %4, %5, %cst {dimension_numbers = #tpu.dot_dimension_numbers<[1], [0], [0], [1], [0, 0, 1, 1], [], []>} : vector<256x128xbf16>, vector<128x128xbf16>, vector<256x128xf32> -> vector<256x128xf32>
    %c0_5 = arith.constant 0 : index
    %c0_6 = arith.constant 0 : index
    %7 = vector.load %arg4[%c0_5, %c0_6] : memref<1x128xf32, #tpu.memory_space<vmem>>, vector<1x128xf32>
    %8 = vector.broadcast %7 : vector<1x128xf32> to vector<256x128xf32>
    %9 = arith.addf %6, %8 : vector<256x128xf32>
    %cst_7 = arith.constant 0.000000e+00 : f32
    %10 = vector.broadcast %cst_7 : f32 to vector<256x128xf32>
    %11 = arith.maximumf %9, %10 : vector<256x128xf32>
    %c0_8 = arith.constant 0 : index
    %c0_9 = arith.constant 0 : index
    %12 = vector.load %arg8[%c0_8, %c0_9] : memref<1x128xf32, #tpu.memory_space<vmem>>, vector<1x128xf32>
    %cst_10 = arith.constant dense<0.000000e+00> : vector<128xf32>
    %13 = vector.multi_reduction <add>, %11, %cst_10 [0] : vector<256x128xf32> to vector<128xf32>
    %14 = vector.shape_cast %13 : vector<128xf32> to vector<1x128xf32>
    %15 = arith.addf %12, %14 : vector<1x128xf32>
    %c0_11 = arith.constant 0 : index
    %c0_12 = arith.constant 0 : index
    %16 = vector.load %arg8[%c0_11, %c0_12] : memref<1x128xf32, #tpu.memory_space<vmem>>, vector<1x128xf32>
    tpu.vector_store %arg8[%c0_11, %c0_12], %15 {strides = array<i32>} : memref<1x128xf32, #tpu.memory_space<vmem>>, vector<1x128xf32>,
    %c0_i32_13 = arith.constant 0 : i32
    %17 = arith.cmpi eq, %arg1, %c0_i32_13 : i32
    %18 = arith.extui %17 : i1 to i32
    %c0_i32_14 = arith.constant 0 : i32
    %19 = arith.cmpi ne, %18, %c0_i32_14 : i32
    scf.if %19 {
      %c0_15 = arith.constant 0 : index
      %c0_16 = arith.constant 0 : index
      %20 = vector.load %arg8[%c0_15, %c0_16] : memref<1x128xf32, #tpu.memory_space<vmem>>, vector<1x128xf32>
      %cst_17 = arith.constant 3.906250e-03 : f32
      %21 = vector.broadcast %cst_17 : f32 to vector<1x128xf32>
      %22 = arith.mulf %20, %21 : vector<1x128xf32>
      %c0_18 = arith.constant 0 : index
      %c0_19 = arith.constant 0 : index
      %23 = vector.load %arg5[%c0_18, %c0_19] : memref<128x128xf32, #tpu.memory_space<vmem>>, vector<128x128xf32>
      %cst_20 = arith.constant dense<0.000000e+00> : vector<1x128xf32>
      %24 = tpu.matmul %22, %23, %cst_20 {dimension_numbers = #tpu.dot_dimension_numbers<[1], [0], [0], [1], [0, 0, 1, 1], [], []>} : vector<1x128xf32>, vector<128x128xf32>, vector<1x128xf32> -> vector<1x128xf32>
      %c0_21 = arith.constant 0 : index
      %c0_22 = arith.constant 0 : index
      %25 = vector.load %arg6[%c0_21, %c0_22] : memref<1x128xf32, #tpu.memory_space<vmem>>, vector<1x128xf32>
      %26 = arith.addf %24, %25 : vector<1x128xf32>
      %c0_23 = arith.constant 0 : index
      %c0_24 = arith.constant 0 : index
      %c0_25 = arith.constant 0 : index
      %27 = vector.load %arg7[%c0_23, %c0_24, %c0_25] : memref<1x1x128xf32, #tpu.memory_space<vmem>>, vector<1x1x128xf32>
      %28 = vector.shape_cast %27 : vector<1x1x128xf32> to vector<1x128xf32>
      %29 = vector.shape_cast %26 : vector<1x128xf32> to vector<1x1x128xf32>
      tpu.vector_store %arg7[%c0_23, %c0_24, %c0_25], %29 {strides = array<i32>} : memref<1x1x128xf32, #tpu.memory_space<vmem>>, vector<1x1x128xf32>,
    } else {
    }
    return
  }
  func.func @transform_0(%arg0: i32, %arg1: i32) -> (i32, i32, i32) {
    %c0_i32 = arith.constant 0 : i32
    %c0_i32_0 = arith.constant 0 : i32
    return %arg0, %arg1, %c0_i32 : i32, i32, i32
  }
  func.func @transform_1(%arg0: i32, %arg1: i32) -> (i32, i32) {
    %c0_i32 = arith.constant 0 : i32
    %c0_i32_0 = arith.constant 0 : i32
    %c0_i32_1 = arith.constant 0 : i32
    return %c0_i32, %c0_i32_0 : i32, i32
  }
  func.func @transform_2(%arg0: i32, %arg1: i32) -> (i32, i32) {
    %c0_i32 = arith.constant 0 : i32
    %c0_i32_0 = arith.constant 0 : i32
    %c0_i32_1 = arith.constant 0 : i32
    return %c0_i32, %c0_i32_0 : i32, i32
  }
  func.func @transform_3(%arg0: i32, %arg1: i32) -> (i32, i32) {
    %c0_i32 = arith.constant 0 : i32
    %c0_i32_0 = arith.constant 0 : i32
    %c0_i32_1 = arith.constant 0 : i32
    return %c0_i32, %c0_i32_0 : i32, i32
  }
  func.func @transform_4(%arg0: i32, %arg1: i32) -> (i32, i32) {
    %c0_i32 = arith.constant 0 : i32
    %c0_i32_0 = arith.constant 0 : i32
    %c0_i32_1 = arith.constant 0 : i32
    return %c0_i32, %c0_i32_0 : i32, i32
  }
  func.func @transform_5(%arg0: i32, %arg1: i32) -> (i32, i32, i32) {
    %c0_i32 = arith.constant 0 : i32
    %c0_i32_0 = arith.constant 0 : i32
    %c0_i32_1 = arith.constant 0 : i32
    return %arg0, %c0_i32, %c0_i32_0 : i32, i32, i32
  }
}

</mosaic_0001>

<llo_original>
// kernel: traced_wrapper_forward.1
$region0: #{traced_wrapper_forward.1}
  #allocation0 [shape = 'u32[]', space=smem, size = 0x4, offset = 0x4, fixed_abs, tag = 'smem constant byte address 0x4 - core index']
  #allocation1 [shape = 'u32[144,128]{1,0:T(1,128)}', space=vmem, size = 0x12000, scoped, tag = 'internal scratch']
  #allocation2 [shape = 'f32[1,128]{1,0:T(1,128)}', space=vmem, size = 0x200, scoped, tag = 'scratch operand']
  %s0 = inlined_call_operand.vmem [shape: bf16[2,256,128], index: 0, kind: input, shape index: {}]
  %s1 = inlined_call_operand.vmem [shape: bf16[128,128], index: 1, kind: input, shape index: {}]
  %s2 = inlined_call_operand.vmem [shape: f32[1,128], index: 2, kind: input, shape index: {}]
  %s3 = inlined_call_operand.vmem [shape: f32[128,128], index: 3, kind: input, shape index: {}]
  %s4 = inlined_call_operand.vmem [shape: f32[1,128], index: 4, kind: input, shape index: {}]
  %s5 = inlined_call_operand.hbm [shape: f32[2,1,128], index: 5, kind: output, shape index: {}]
  %s6 = sld [smem:[#allocation0]]
  $region61: #{traced_wrapper_forward.1} parent=0
    _
  %s8 = ssub.s32 1, %s6
  %s9 = scalar_select 0, %s8, %s6
  $region1: #{traced_wrapper_forward.1} parent=0
    #allocation3 [shape = 'u8[1024]{0}', space=vmem, size = 0x400, scoped, tag = 'output window, operand 0']
    #allocation4 [shape = 's32[2]{0}', space=sflag, size = 0x8, scoped, tag = 'scoped memory for traced_wrapper_forward.1']
    %10 = vsyncpa [#allocation4], 0
    %s11 = scalar_lea.sflag [#allocation4], 1
    %12 = vsyncpa %s11, 0
    loop: start=0, step=1, limit=4
    $region2: #{traced_wrapper_forward.1} parent=1 // loop_pre_header
      _
    $region3: #{traced_wrapper_forward.1} parent=1 // loop_header
      %s14 = sphi 0, %s18
      %p15 = scmp.ge.s32.totalorder %s14, 4
      %s21 = sphi 0, %s33
      %s22 = sphi 0, %s29
      %s23 = sphi 0, %s21
      %s24 = sphi 0, %s22
      %s25 = sphi 0, %s23
      %s26 = sphi 0, %s24
      %s38 = sphi 0, %s40
      %s41 = sphi 0, %s38
      %s42 = sphi 0, %s41
      %s58 = sphi 0, %s42
      %s62 = sphi 0, %s62
      %s64 = sphi 0, %s62
      %s65 = sphi 0, %s64
      %s79 = sphi 0, %s65
      %s83 = sphi 0, %s83
      %s85 = sphi 0, %s83
      %s86 = sphi 0, %s85
      %s100 = sphi 0, %s86
      %s104 = sphi 0, %s104
      %s106 = sphi 0, %s104
      %s107 = sphi 0, %s106
      %s121 = sphi 0, %s107
      %s125 = sphi 0, %s125
      %s127 = sphi 0, %s125
      %s128 = sphi 0, %s127
      %s142 = sphi 0, %s128
      %s148 = sphi 0, %s150
      %s151 = sphi 0, %s148
      %s152 = sphi 0, %s151
      %s168 = sphi 0, %s152
    $region4: #{traced_wrapper_forward.1} parent=1 // loop_header_branch
      %17 = sbr.rel (%p15) target = $region8
    $region5: #{traced_wrapper_forward.1} parent=1 // loop_body
      %s19 = ssub.s32 %s14, 1
      %s20 = ssub.s32 %s14, 2
      %s27 = sadd.s32 1, %s22
      %p28 = scmp.ge.s32.totalorder %s27, 1
      %s29 = scalar_select %p28, 0, %s27
      %s30 = sadd.s32 1, %s21
      %s31 = scalar_select %p28, %s30, %s21
      %p32 = scmp.ge.s32.totalorder %s31, 2
      %s33 = scalar_select %p32, 0, %s31
      %s34 = ssub.s32 %s21, %s33
      %s35 = ssub.s32 %s22, %s29
      %s36 = sor.u32 %s34, %s35
      %p37 = scmp.eq.s32.totalorder %s36, 0
      %s39 = sadd.s32 %s38, 1
      %s40 = scalar_select %p37, %s38, %s39
      %p43 = pneg %p37
      %p44 = scmp.eq.s32.totalorder %s14, 1
      %p45 = por %p43, %p44
      %p46 = scmp.ne.s32.totalorder %s38, %s41
      %p47 = scmp.eq.s32.totalorder %s14, 0
      %p48 = por %p46, %p47
      %p49 = scmp.ne.s32.totalorder %s38, %s41
      %p50 = scmp.eq.s32.totalorder %s19, 1
      %p51 = por %p49, %p50
      %p52 = scmp.ne.s32.totalorder %s41, %s42
      %p53 = scmp.eq.s32.totalorder %s19, 0
      %p54 = por %p52, %p53
      %p55 = scmp.ne.s32.totalorder %s41, %s42
      %p56 = scmp.eq.s32.totalorder %s20, 1
      %p57 = por %p55, %p56
      %p59 = scmp.ne.s32.totalorder %s42, %s58
      %p60 = scmp.eq.s32.totalorder %s20, 0
      %p61 = por %p59, %p60
      %s63 = sadd.s32 %s62, 1
      %p66 = scmp.eq.s32.totalorder %s14, 1
      %p67 = scmp.ne.s32.totalorder %s62, %s64
      %p68 = scmp.eq.s32.totalorder %s14, 0
      %p69 = por %p67, %p68
      %p70 = scmp.ne.s32.totalorder %s62, %s64
      %p71 = scmp.eq.s32.totalorder %s19, 1
      %p72 = por %p70, %p71
      %p73 = scmp.ne.s32.totalorder %s64, %s65
      %p74 = scmp.eq.s32.totalorder %s19, 0
      %p75 = por %p73, %p74
      %p76 = scmp.ne.s32.totalorder %s64, %s65
      %p77 = scmp.eq.s32.totalorder %s20, 1
      %p78 = por %p76, %p77
      %p80 = scmp.ne.s32.totalorder %s65, %s79
      %p81 = scmp.eq.s32.totalorder %s20, 0
      %p82 = por %p80, %p81
      %s84 = sadd.s32 %s83, 1
      %p87 = scmp.eq.s32.totalorder %s14, 1
      %p88 = scmp.ne.s32.totalorder %s83, %s85
      %p89 = scmp.eq.s32.totalorder %s14, 0
      %p90 = por %p88, %p89
      %p91 = scmp.ne.s32.totalorder %s83, %s85
      %p92 = scmp.eq.s32.totalorder %s19, 1
      %p93 = por %p91, %p92
      %p94 = scmp.ne.s32.totalorder %s85, %s86
      %p95 = scmp.eq.s32.totalorder %s19, 0
      %p96 = por %p94, %p95
      %p97 = scmp.ne.s32.totalorder %s85, %s86
      %p98 = scmp.eq.s32.totalorder %s20, 1
      %p99 = por %p97, %p98
      %p101 = scmp.ne.s32.totalorder %s86, %s100
      %p102 = scmp.eq.s32.totalorder %s20, 0
      %p103 = por %p101, %p102
      %s105 = sadd.s32 %s104, 1
      %p108 = scmp.eq.s32.totalorder %s14, 1
      %p109 = scmp.ne.s32.totalorder %s104, %s106
      %p110 = scmp.eq.s32.totalorder %s14, 0
      %p111 = por %p109, %p110
      %p112 = scmp.ne.s32.totalorder %s104, %s106
      %p113 = scmp.eq.s32.totalorder %s19, 1
      %p114 = por %p112, %p113
      %p115 = scmp.ne.s32.totalorder %s106, %s107
      %p116 = scmp.eq.s32.totalorder %s19, 0
      %p117 = por %p115, %p116
      %p118 = scmp.ne.s32.totalorder %s106, %s107
      %p119 = scmp.eq.s32.totalorder %s20, 1
      %p120 = por %p118, %p119
      %p122 = scmp.ne.s32.totalorder %s107, %s121
      %p123 = scmp.eq.s32.totalorder %s20, 0
      %p124 = por %p122, %p123
      %s126 = sadd.s32 %s125, 1
      %p129 = scmp.eq.s32.totalorder %s14, 1
      %p130 = scmp.ne.s32.totalorder %s125, %s127
      %p131 = scmp.eq.s32.totalorder %s14, 0
      %p132 = por %p130, %p131
      %p133 = scmp.ne.s32.totalorder %s125, %s127
      %p134 = scmp.eq.s32.totalorder %s19, 1
      %p135 = por %p133, %p134
      %p136 = scmp.ne.s32.totalorder %s127, %s128
      %p137 = scmp.eq.s32.totalorder %s19, 0
      %p138 = por %p136, %p137
      %p139 = scmp.ne.s32.totalorder %s127, %s128
      %p140 = scmp.eq.s32.totalorder %s20, 1
      %p141 = por %p139, %p140
      %p143 = scmp.ne.s32.totalorder %s128, %s142
      %p144 = scmp.eq.s32.totalorder %s20, 0
      %p145 = por %p143, %p144
      %s146 = ssub.s32 %s21, %s33
      %p147 = scmp.eq.s32.totalorder %s146, 0
      %s149 = sadd.s32 %s148, 1
      %s150 = scalar_select %p147, %s148, %s149
      %p153 = pneg %p147
      %p154 = scmp.eq.s32.totalorder %s14, 1
      %p155 = por %p153, %p154
      %p156 = scmp.ne.s32.totalorder %s148, %s151
      %p157 = scmp.eq.s32.totalorder %s14, 0
      %p158 = por %p156, %p157
      %p159 = scmp.ne.s32.totalorder %s148, %s151
      %p160 = scmp.eq.s32.totalorder %s19, 1
      %p161 = por %p159, %p160
      %p162 = scmp.ne.s32.totalorder %s151, %s152
      %p163 = scmp.eq.s32.totalorder %s19, 0
      %p164 = por %p162, %p163
      %p165 = scmp.ne.s32.totalorder %s151, %s152
      %p166 = scmp.eq.s32.totalorder %s20, 1
      %p167 = por %p165, %p166
      %p169 = scmp.ne.s32.totalorder %s152, %s168
      %p170 = scmp.eq.s32.totalorder %s20, 0
      %p171 = por %p169, %p170
      %p172 = scmp.le.s32.totalorder 1, %s14
      %p173 = scmp.lt.s32.totalorder %s14, 3
      %p174 = pnand %p172, %p173
      %p175 = pneg %p174
      // Predicated region
      $region9: #{traced_wrapper_forward.1} parent=5 // pred_check
        _
      $region10: #{traced_wrapper_forward.1} parent=5 // pred_check_branch
        %177 = sbr.rel (%p174) target = $region12
      $region11: #{traced_wrapper_forward.1} parent=5 // pred_region
        %s178 = ssub.s32 %s14, 1
        // Predicated region
        $region13: #{traced_wrapper_forward.1} parent=11 // pred_check
          %p179 = pneg %p75
        $region14: #{traced_wrapper_forward.1} parent=11 // pred_check_branch
          %181 = sbr.rel (%p179) target = $region16
        $region15: #{traced_wrapper_forward.1} parent=11 // pred_region
          _
        $region16: #{traced_wrapper_forward.1} parent=11 // pred_fallthru
          _
        // Predicated region
        $region17: #{traced_wrapper_forward.1} parent=11 // pred_check
          %p182 = pneg %p96
        $region18: #{traced_wrapper_forward.1} parent=11 // pred_check_branch
          %184 = sbr.rel (%p182) target = $region20
        $region19: #{traced_wrapper_forward.1} parent=11 // pred_region
          _
        $region20: #{traced_wrapper_forward.1} parent=11 // pred_fallthru
          _
        // Predicated region
        $region21: #{traced_wrapper_forward.1} parent=11 // pred_check
          %p185 = pneg %p117
        $region22: #{traced_wrapper_forward.1} parent=11 // pred_check_branch
          %187 = sbr.rel (%p185) target = $region24
        $region23: #{traced_wrapper_forward.1} parent=11 // pred_region
          _
        $region24: #{traced_wrapper_forward.1} parent=11 // pred_fallthru
          _
        // Predicated region
        $region25: #{traced_wrapper_forward.1} parent=11 // pred_check
          %p188 = pneg %p138
        $region26: #{traced_wrapper_forward.1} parent=11 // pred_check_branch
          %190 = sbr.rel (%p188) target = $region28
        $region27: #{traced_wrapper_forward.1} parent=11 // pred_region
          _
        $region28: #{traced_wrapper_forward.1} parent=11 // pred_fallthru
          _
      $region12: #{traced_wrapper_forward.1} parent=5 // pred_fallthru
        _
      %p191 = scmp.lt.s32.totalorder %s14, 2
      // Predicated region
      $region29: #{traced_wrapper_forward.1} parent=5 // pred_check
        %p192 = pneg %p191
      $region30: #{traced_wrapper_forward.1} parent=5 // pred_check_branch
        %194 = sbr.rel (%p192) target = $region32
      $region31: #{traced_wrapper_forward.1} parent=5 // pred_region
        // Predicated region
        $region33: #{traced_wrapper_forward.1} parent=31 // pred_check
          %p195 = pneg %p48
        $region34: #{traced_wrapper_forward.1} parent=31 // pred_check_branch
          %197 = sbr.rel (%p195) target = $region36
        $region35: #{traced_wrapper_forward.1} parent=31 // pred_region
          %s198 = smul.u32 32, %s22
          %p199 = scmp.lt.s32.totalorder %s21, 1
          %s200 = scalar_select %p199, %s21, 1
          %p201 = scmp.lt.s32.totalorder %s198, 31
          %s202 = scalar_select %p201, %s198, 31
          %s203 = smul.addr %s200, 32
          %s204 = sadd.s32 %s202, %s203
          %s205 = smul.addr %s204, 4
          %s206 = scalar_lea.vmem %s0, %s205
          %s207 = smul.u32 32, %s22
        $region36: #{traced_wrapper_forward.1} parent=31 // pred_fallthru
          _
      $region32: #{traced_wrapper_forward.1} parent=5 // pred_fallthru
        _
      %p208 = scmp.le.s32.totalorder 1, %s14
      %p209 = scmp.lt.s32.totalorder %s14, 3
      %p210 = pnand %p208, %p209
      %p211 = pneg %p210
      // Predicated region
      $region37: #{traced_wrapper_forward.1} parent=5 // pred_check
        _
      $region38: #{traced_wrapper_forward.1} parent=5 // pred_check_branch
        %213 = sbr.rel (%p210) target = $region40
      $region39: #{traced_wrapper_forward.1} parent=5 // pred_region
        %s214 = ssub.s32 %s14, 1
        %s215 = smul.u32 32, %s24
        %p216 = scmp.lt.s32.totalorder %s23, 1
        %s217 = scalar_select %p216, %s23, 1
        %p218 = scmp.lt.s32.totalorder %s215, 31
        %s219 = scalar_select %p218, %s215, 31
        %s220 = smul.addr %s217, 32
        %s221 = sadd.s32 %s219, %s220
        %s222 = smul.addr %s221, 4
        %s223 = scalar_lea.vmem %s0, %s222
        %p224 = pneg %p54
        %p225 = pneg %p51
        %p226 = pneg %p75
        %p227 = pneg %p72
        %p228 = pneg %p96
        %p229 = pneg %p93
        %p230 = pneg %p117
        %p231 = pneg %p114
        %p232 = pneg %p138
        %p233 = pneg %p135
        %p234 = pneg %p164
        %p235 = pneg %p161
        %s236 = sand.u32 %s151, 1
        %s237 = scalar_lea.sflag [#allocation4], %s236
        %s238 = sand.u32 %s151, 1
        %s239 = scalar_lea.vmem [#allocation3], %s238
        %s240 = smul.u32 32, %s24
        %p241 = scmp.lt.s32.totalorder %s23, 1
        %s242 = scalar_select %p241, %s23, 1
        %p243 = scmp.lt.s32.totalorder %s240, 31
        %s244 = scalar_select %p243, %s240, 31
        %s245 = smul.addr %s242, 32
        %s246 = sadd.s32 %s244, %s245
        %s247 = smul.addr %s246, 4
        %s248 = scalar_lea.vmem %s0, %s247
        %s249 = smul.u32 32, %s24
        %p251 = scmp.eq.s32.totalorder %s24, 0
        // Predicated region
        $region41: #{traced_wrapper_forward.1} parent=39 // pred_check
          %p252 = pneg %p251
        $region42: #{traced_wrapper_forward.1} parent=39 // pred_check_branch
          %254 = sbr.rel (%p252) target = $region44
        $region43: #{traced_wrapper_forward.1} parent=39 // pred_region
          %255 = vst [vmem:[#allocation2] sm:$0x1] 0.0
        $region44: #{traced_wrapper_forward.1} parent=39 // pred_fallthru
          _
        %v256 = vld [vmem:[%s248] sm:$0xf]
        %v257 = vld [vmem:[%s248 + $0x4] sm:$0xf]
        %v258 = vld [vmem:[%s248 + $0x8] sm:$0xf]
        %v259 = vld [vmem:[%s248 + $0xc] sm:$0xf]
        %v260 = vld [vmem:[%s248 + $0x10] sm:$0xf]
        %v261 = vld [vmem:[%s248 + $0x14] sm:$0xf]
        %v262 = vld [vmem:[%s248 + $0x18] sm:$0xf]
        %v263 = vld [vmem:[%s248 + $0x1c] sm:$0xf]
        %v264 = vld [vmem:[%s248 + $0x20] sm:$0xf]
        %v265 = vld [vmem:[%s248 + $0x24] sm:$0xf]
        %v266 = vld [vmem:[%s248 + $0x28] sm:$0xf]
        %v267 = vld [vmem:[%s248 + $0x2c] sm:$0xf]
        %v268 = vld [vmem:[%s248 + $0x30] sm:$0xf]
        %v269 = vld [vmem:[%s248 + $0x34] sm:$0xf]
        %v270 = vld [vmem:[%s248 + $0x38] sm:$0xf]
        %v271 = vld [vmem:[%s248 + $0x3c] sm:$0xf]
        %v272 = vld [vmem:[%s248 + $0x40] sm:$0xf]
        %v273 = vld [vmem:[%s248 + $0x44] sm:$0xf]
        %v274 = vld [vmem:[%s248 + $0x48] sm:$0xf]
        %v275 = vld [vmem:[%s248 + $0x4c] sm:$0xf]
        %v276 = vld [vmem:[%s248 + $0x50] sm:$0xf]
        %v277 = vld [vmem:[%s248 + $0x54] sm:$0xf]
        %v278 = vld [vmem:[%s248 + $0x58] sm:$0xf]
        %v279 = vld [vmem:[%s248 + $0x5c] sm:$0xf]
        %v280 = vld [vmem:[%s248 + $0x60] sm:$0xf]
        %v281 = vld [vmem:[%s248 + $0x64] sm:$0xf]
        %v282 = vld [vmem:[%s248 + $0x68] sm:$0xf]
        %v283 = vld [vmem:[%s248 + $0x6c] sm:$0xf]
        %v284 = vld [vmem:[%s248 + $0x70] sm:$0xf]
        %v285 = vld [vmem:[%s248 + $0x74] sm:$0xf]
        %v286 = vld [vmem:[%s248 + $0x78] sm:$0xf]
        %v287 = vld [vmem:[%s248 + $0x7c] sm:$0xf]
        %v288 = vld [vmem:[%s1] sm:$0xf]
        %v289 = vld [vmem:[%s1 + $0x4] sm:$0xf]
        %v290 = vld [vmem:[%s1 + $0x8] sm:$0xf]
        %v291 = vld [vmem:[%s1 + $0xc] sm:$0xf]
        %v292 = vld [vmem:[%s1 + $0x10] sm:$0xf]
        %v293 = vld [vmem:[%s1 + $0x14] sm:$0xf]
        %v294 = vld [vmem:[%s1 + $0x18] sm:$0xf]
        %v295 = vld [vmem:[%s1 + $0x1c] sm:$0xf]
        %v296 = vld [vmem:[%s1 + $0x20] sm:$0xf]
        %v297 = vld [vmem:[%s1 + $0x24] sm:$0xf]
        %v298 = vld [vmem:[%s1 + $0x28] sm:$0xf]
        %v299 = vld [vmem:[%s1 + $0x2c] sm:$0xf]
        %v300 = vld [vmem:[%s1 + $0x30] sm:$0xf]
        %v301 = vld [vmem:[%s1 + $0x34] sm:$0xf]
        %v302 = vld [vmem:[%s1 + $0x38] sm:$0xf]
        %v303 = vld [vmem:[%s1 + $0x3c] sm:$0xf]
        %v304 = vld [vmem:[%s2] sm:$0x1]
        %v306 = vlaneseq
        %v307 = vshrl.u32 %v306, 7
        %v308 = vsub.s32 0, %v307
        %v309 = vrot.slane %v304, %v308
        %v343 = vunpack.c.l.b16 %v256
        %v344 = vunpack.c.l.b16 %v257
        %v345 = vunpack.c.l.b16 %v258
        %v346 = vunpack.c.l.b16 %v259
        %v347 = vunpack.c.l.b16 %v260
        %v348 = vunpack.c.l.b16 %v261
        %v349 = vunpack.c.l.b16 %v262
        %v350 = vunpack.c.l.b16 %v263
        %v351 = vunpack.c.l.b16 %v264
        %v352 = vunpack.c.l.b16 %v265
        %v353 = vunpack.c.l.b16 %v266
        %v354 = vunpack.c.l.b16 %v267
        %v355 = vunpack.c.l.b16 %v268
        %v356 = vunpack.c.l.b16 %v269
        %v357 = vunpack.c.l.b16 %v270
        %v358 = vunpack.c.l.b16 %v271
        %v359 = vunpack.c.l.b16 %v272
        %v360 = vunpack.c.l.b16 %v273
        %v361 = vunpack.c.l.b16 %v274
        %v362 = vunpack.c.l.b16 %v275
        %v363 = vunpack.c.l.b16 %v276
        %v364 = vunpack.c.l.b16 %v277
        %v365 = vunpack.c.l.b16 %v278
        %v366 = vunpack.c.l.b16 %v279
        %v367 = vunpack.c.l.b16 %v280
        %v368 = vunpack.c.l.b16 %v281
        %v369 = vunpack.c.l.b16 %v282
        %v370 = vunpack.c.l.b16 %v283
        %v371 = vunpack.c.l.b16 %v284
        %v372 = vunpack.c.l.b16 %v285
        %v373 = vunpack.c.l.b16 %v286
        %v374 = vunpack.c.l.b16 %v287
        %v375 = vpack.c.b16 %v344, %v343
        %v376 = vpack.c.b16 %v346, %v345
        %v377 = vpack.c.b16 %v348, %v347
        %v378 = vpack.c.b16 %v350, %v349
        %v379 = vpack.c.b16 %v352, %v351
        %v380 = vpack.c.b16 %v354, %v353
        %v381 = vpack.c.b16 %v356, %v355
        %v382 = vpack.c.b16 %v358, %v357
        %v383 = vpack.c.b16 %v360, %v359
        %v384 = vpack.c.b16 %v362, %v361
        %v385 = vpack.c.b16 %v364, %v363
        %v386 = vpack.c.b16 %v366, %v365
        %v387 = vpack.c.b16 %v368, %v367
        %v388 = vpack.c.b16 %v370, %v369
        %v389 = vpack.c.b16 %v372, %v371
        %v390 = vpack.c.b16 %v374, %v373
        %v423 = vunpack.c.l.b16 %v288
        %v424 = vunpack.c.l.b16 %v289
        %v425 = vunpack.c.l.b16 %v290
        %v426 = vunpack.c.l.b16 %v291
        %v427 = vunpack.c.l.b16 %v292
        %v428 = vunpack.c.l.b16 %v293
        %v429 = vunpack.c.l.b16 %v294
        %v430 = vunpack.c.l.b16 %v295
        %v431 = vunpack.c.l.b16 %v296
        %v432 = vunpack.c.l.b16 %v297
        %v433 = vunpack.c.l.b16 %v298
        %v434 = vunpack.c.l.b16 %v299
        %v435 = vunpack.c.l.b16 %v300
        %v436 = vunpack.c.l.b16 %v301
        %v437 = vunpack.c.l.b16 %v302
        %v438 = vunpack.c.l.b16 %v303
        %v439 = vpack.c.b16 %v424, %v423
        %v440 = vpack.c.b16 %v426, %v425
        %v441 = vpack.c.b16 %v428, %v427
        %v442 = vpack.c.b16 %v430, %v429
        %v443 = vpack.c.b16 %v432, %v431
        %v444 = vpack.c.b16 %v434, %v433
        %v445 = vpack.c.b16 %v436, %v435
        %v446 = vpack.c.b16 %v438, %v437
        %455 = vmatprep.subr.bf16.mxu0 0
        %456 = vmatpush1.bf16.msra.mxu0 %v446
        %457 = vmatprep.subr.bf16.mxu0 0
        %458 = vmatpush1.bf16.msra.mxu0 %v445
        %459 = vmatprep.subr.bf16.mxu0 0
        %460 = vmatpush1.bf16.msra.mxu0 %v444
        %461 = vmatprep.subr.bf16.mxu0 0
        %462 = vmatpush1.bf16.msra.mxu0 %v443
        %463 = vmatprep.subr.bf16.mxu0 0
        %464 = vmatpush1.bf16.msra.mxu0 %v442
        %465 = vmatprep.subr.bf16.mxu0 0
        %466 = vmatpush1.bf16.msra.mxu0 %v441
        %467 = vmatprep.subr.bf16.mxu0 0
        %468 = vmatpush1.bf16.msra.mxu0 %v440
        %469 = vmatprep.subr.bf16.mxu0 0
        %470 = vmatpush1.bf16.msra.mxu0 %v439
        %471 = vmatprep.subr.bf16.mxu0 0
        %472 = vmatpush2.bf16.msra.mxu0 0
        %473 = vmatprep.subr.bf16.mxu0 0
        %474 = vmatpush2.bf16.msra.mxu0 0
        %475 = vmatprep.subr.bf16.mxu0 0
        %476 = vmatpush2.bf16.msra.mxu0 0
        %477 = vmatprep.subr.bf16.mxu0 0
        %478 = vmatpush2.bf16.msra.mxu0 0
        %479 = vmatprep.subr.bf16.mxu0 0
        %480 = vmatpush2.bf16.msra.mxu0 0
        %481 = vmatprep.subr.bf16.mxu0 0
        %482 = vmatpush2.bf16.msra.mxu0 0
        %483 = vmatprep.subr.bf16.mxu0 0
        %484 = vmatpush2.bf16.msra.mxu0 0
        %485 = vmatprep.subr.bf16.mxu0 0
        %486 = vmatpush2.bf16.msra.mxu0 0
        %487 = vmatprep.mubr.bf16.mxu0 0
        %488 = vmatmul.mubr.bf16.gmra.mxu0 %v375
        %v489 = vpop.f32.mrf.mxu0
        %v490 = vadd.f32 %v309, %v489
        %v491 = vpop.f32.mrf.mxu0
        %v492 = vpop.f32.mrf.mxu0
        %v493 = vadd.f32 %v309, %v492
        %v494 = vpop.f32.mrf.mxu0
        %495 = vmatprep.mubr.bf16.mxu0 0
        %496 = vmatmul.mubr.bf16.gmra.mxu0 %v376
        %v497 = vpop.f32.mrf.mxu0
        %v498 = vadd.f32 %v309, %v497
        %v499 = vpop.f32.mrf.mxu0
        %v500 = vpop.f32.mrf.mxu0
        %v501 = vadd.f32 %v309, %v500
        %v502 = vpop.f32.mrf.mxu0
        %503 = vmatprep.mubr.bf16.mxu0 0
        %504 = vmatmul.mubr.bf16.gmra.mxu0 %v377
        %v505 = vpop.f32.mrf.mxu0
        %v506 = vadd.f32 %v309, %v505
        %v507 = vpop.f32.mrf.mxu0
        %v508 = vpop.f32.mrf.mxu0
        %v509 = vadd.f32 %v309, %v508
        %v510 = vpop.f32.mrf.mxu0
        %511 = vmatprep.mubr.bf16.mxu0 0
        %512 = vmatmul.mubr.bf16.gmra.mxu0 %v378
        %v513 = vpop.f32.mrf.mxu0
        %v514 = vadd.f32 %v309, %v513
        %v515 = vpop.f32.mrf.mxu0
        %v516 = vpop.f32.mrf.mxu0
        %v517 = vadd.f32 %v309, %v516
        %v518 = vpop.f32.mrf.mxu0
        %519 = vmatprep.mubr.bf16.mxu0 0
        %520 = vmatmul.mubr.bf16.gmra.mxu0 %v379
        %v521 = vpop.f32.mrf.mxu0
        %v522 = vadd.f32 %v309, %v521
        %v523 = vpop.f32.mrf.mxu0
        %v524 = vpop.f32.mrf.mxu0
        %v525 = vadd.f32 %v309, %v524
        %v526 = vpop.f32.mrf.mxu0
        %527 = vmatprep.mubr.bf16.mxu0 0
        %528 = vmatmul.mubr.bf16.gmra.mxu0 %v380
        %v529 = vpop.f32.mrf.mxu0
        %v530 = vadd.f32 %v309, %v529
        %v531 = vpop.f32.mrf.mxu0
        %v532 = vpop.f32.mrf.mxu0
        %v533 = vadd.f32 %v309, %v532
        %v534 = vpop.f32.mrf.mxu0
        %535 = vmatprep.mubr.bf16.mxu0 0
        %536 = vmatmul.mubr.bf16.gmra.mxu0 %v381
        %v537 = vpop.f32.mrf.mxu0
        %v538 = vadd.f32 %v309, %v537
        %v539 = vpop.f32.mrf.mxu0
        %v540 = vpop.f32.mrf.mxu0
        %v541 = vadd.f32 %v309, %v540
        %v542 = vpop.f32.mrf.mxu0
        %543 = vmatprep.mubr.bf16.mxu0 0
        %544 = vmatmul.mubr.bf16.gmra.mxu0 %v382
        %v545 = vpop.f32.mrf.mxu0
        %v546 = vadd.f32 %v309, %v545
        %v547 = vpop.f32.mrf.mxu0
        %v548 = vpop.f32.mrf.mxu0
        %v549 = vadd.f32 %v309, %v548
        %v550 = vpop.f32.mrf.mxu0
        %551 = vmatprep.mubr.bf16.mxu0 0
        %552 = vmatmul.mubr.bf16.gmra.mxu0 %v383
        %v553 = vpop.f32.mrf.mxu0
        %v554 = vadd.f32 %v309, %v553
        %v555 = vpop.f32.mrf.mxu0
        %v556 = vpop.f32.mrf.mxu0
        %v557 = vadd.f32 %v309, %v556
        %v558 = vpop.f32.mrf.mxu0
        %559 = vmatprep.mubr.bf16.mxu0 0
        %560 = vmatmul.mubr.bf16.gmra.mxu0 %v384
        %v561 = vpop.f32.mrf.mxu0
        %v562 = vadd.f32 %v309, %v561
        %v563 = vpop.f32.mrf.mxu0
        %v564 = vpop.f32.mrf.mxu0
        %v565 = vadd.f32 %v309, %v564
        %v566 = vpop.f32.mrf.mxu0
        %567 = vmatprep.mubr.bf16.mxu0 0
        %568 = vmatmul.mubr.bf16.gmra.mxu0 %v385
        %v569 = vpop.f32.mrf.mxu0
        %v570 = vadd.f32 %v309, %v569
        %v571 = vpop.f32.mrf.mxu0
        %v572 = vpop.f32.mrf.mxu0
        %v573 = vadd.f32 %v309, %v572
        %v574 = vpop.f32.mrf.mxu0
        %575 = vmatprep.mubr.bf16.mxu0 0
        %576 = vmatmul.mubr.bf16.gmra.mxu0 %v386
        %v577 = vpop.f32.mrf.mxu0
        %v578 = vadd.f32 %v309, %v577
        %v579 = vpop.f32.mrf.mxu0
        %v580 = vpop.f32.mrf.mxu0
        %v581 = vadd.f32 %v309, %v580
        %v582 = vpop.f32.mrf.mxu0
        %583 = vmatprep.mubr.bf16.mxu0 0
        %584 = vmatmul.mubr.bf16.gmra.mxu0 %v387
        %v585 = vpop.f32.mrf.mxu0
        %v586 = vadd.f32 %v309, %v585
        %v587 = vpop.f32.mrf.mxu0
        %v588 = vpop.f32.mrf.mxu0
        %v589 = vadd.f32 %v309, %v588
        %v590 = vpop.f32.mrf.mxu0
        %591 = vmatprep.mubr.bf16.mxu0 0
        %592 = vmatmul.mubr.bf16.gmra.mxu0 %v388
        %v593 = vpop.f32.mrf.mxu0
        %v594 = vadd.f32 %v309, %v593
        %v595 = vpop.f32.mrf.mxu0
        %v596 = vpop.f32.mrf.mxu0
        %v597 = vadd.f32 %v309, %v596
        %v598 = vpop.f32.mrf.mxu0
        %599 = vmatprep.mubr.bf16.mxu0 0
        %600 = vmatmul.mubr.bf16.gmra.mxu0 %v389
        %v601 = vpop.f32.mrf.mxu0
        %v602 = vadd.f32 %v309, %v601
        %v603 = vpop.f32.mrf.mxu0
        %v604 = vpop.f32.mrf.mxu0
        %v605 = vadd.f32 %v309, %v604
        %v606 = vpop.f32.mrf.mxu0
        %607 = vmatprep.mubr.bf16.mxu0 0
        %608 = vmatmul.mubr.bf16.gmra.mxu0 %v390
        %v609 = vpop.f32.mrf.mxu0
        %v610 = vadd.f32 %v309, %v609
        %v611 = vpop.f32.mrf.mxu0
        %v612 = vpop.f32.mrf.mxu0
        %v613 = vadd.f32 %v309, %v612
        %v614 = vpop.f32.mrf.mxu0
        %615 = vdwg.mxu0
        %v616 = vmax.f32 %v490, 0.0
        %v617 = vmax.f32 %v493, 0.0
        %v618 = vmax.f32 %v498, 0.0
        %v619 = vmax.f32 %v501, 0.0
        %v620 = vmax.f32 %v506, 0.0
        %v621 = vmax.f32 %v509, 0.0
        %v622 = vmax.f32 %v514, 0.0
        %v623 = vmax.f32 %v517, 0.0
        %v624 = vmax.f32 %v522, 0.0
        %v625 = vmax.f32 %v525, 0.0
        %v626 = vmax.f32 %v530, 0.0
        %v627 = vmax.f32 %v533, 0.0
        %v628 = vmax.f32 %v538, 0.0
        %v629 = vmax.f32 %v541, 0.0
        %v630 = vmax.f32 %v546, 0.0
        %v631 = vmax.f32 %v549, 0.0
        %v632 = vmax.f32 %v554, 0.0
        %v633 = vmax.f32 %v557, 0.0
        %v634 = vmax.f32 %v562, 0.0
        %v635 = vmax.f32 %v565, 0.0
        %v636 = vmax.f32 %v570, 0.0
        %v637 = vmax.f32 %v573, 0.0
        %v638 = vmax.f32 %v578, 0.0
        %v639 = vmax.f32 %v581, 0.0
        %v640 = vmax.f32 %v586, 0.0
        %v641 = vmax.f32 %v589, 0.0
        %v642 = vmax.f32 %v594, 0.0
        %v643 = vmax.f32 %v597, 0.0
        %v644 = vmax.f32 %v602, 0.0
        %v645 = vmax.f32 %v605, 0.0
        %v646 = vmax.f32 %v610, 0.0
        %v647 = vmax.f32 %v613, 0.0
        %v648 = vld [vmem:[#allocation2] sm:$0x1]
        %v649 = vadd.f32 %v616, %v617
        %v650 = vadd.f32 %v649, %v618
        %v651 = vadd.f32 %v650, %v619
        %v652 = vadd.f32 %v651, %v620
        %v653 = vadd.f32 %v652, %v621
        %v654 = vadd.f32 %v653, %v622
        %v655 = vadd.f32 %v654, %v623
        %v656 = vadd.f32 %v655, %v624
        %v657 = vadd.f32 %v656, %v625
        %v658 = vadd.f32 %v657, %v626
        %v659 = vadd.f32 %v658, %v627
        %v660 = vadd.f32 %v659, %v628
        %v661 = vadd.f32 %v660, %v629
        %v662 = vadd.f32 %v661, %v630
        %v663 = vadd.f32 %v662, %v631
        %v664 = vadd.f32 %v663, %v632
        %v665 = vadd.f32 %v664, %v633
        %v666 = vadd.f32 %v665, %v634
        %v667 = vadd.f32 %v666, %v635
        %v668 = vadd.f32 %v667, %v636
        %v669 = vadd.f32 %v668, %v637
        %v670 = vadd.f32 %v669, %v638
        %v671 = vadd.f32 %v670, %v639
        %v672 = vadd.f32 %v671, %v640
        %v673 = vadd.f32 %v672, %v641
        %v674 = vadd.f32 %v673, %v642
        %v675 = vadd.f32 %v674, %v643
        %v676 = vadd.f32 %v675, %v644
        %v677 = vadd.f32 %v676, %v645
        %v678 = vadd.f32 %v677, %v646
        %v679 = vadd.f32 %v678, %v647
        %v680 = vrot.slane %v679, 4
        %v681 = vadd.f32 %v679, %v680
        %v682 = vrot.slane %v681, 2
        %v683 = vadd.f32 %v681, %v682
        %v684 = vrot.slane %v683, 1
        %v685 = vadd.f32 %v683, %v684
        %v686 = vadd.f32 %v648, %v685
        %687 = vst [vmem:[#allocation2] sm:$0x1] %v686
        // Predicated region
        $region45: #{traced_wrapper_forward.1} parent=39 // pred_check
          %p688 = pneg %p251
        $region46: #{traced_wrapper_forward.1} parent=39 // pred_check_branch
          %690 = sbr.rel (%p688) target = $region48
        $region47: #{traced_wrapper_forward.1} parent=39 // pred_region
          %v691 = vld [vmem:[#allocation2] sm:$0x1]
          %v692 = vmul.f32 %v691, 0.00390625
          %v693 = vld [vmem:[%s3] sm:$0xff]
          %v694 = vld [vmem:[%s3 + $0x8] sm:$0xff]
          %v695 = vld [vmem:[%s3 + $0x10] sm:$0xff]
          %v696 = vld [vmem:[%s3 + $0x18] sm:$0xff]
          %v697 = vld [vmem:[%s3 + $0x20] sm:$0xff]
          %v698 = vld [vmem:[%s3 + $0x28] sm:$0xff]
          %v699 = vld [vmem:[%s3 + $0x30] sm:$0xff]
          %v700 = vld [vmem:[%s3 + $0x38] sm:$0xff]
          %v701 = vld [vmem:[%s3 + $0x40] sm:$0xff]
          %v702 = vld [vmem:[%s3 + $0x48] sm:$0xff]
          %v703 = vld [vmem:[%s3 + $0x50] sm:$0xff]
          %v704 = vld [vmem:[%s3 + $0x58] sm:$0xff]
          %v705 = vld [vmem:[%s3 + $0x60] sm:$0xff]
          %v706 = vld [vmem:[%s3 + $0x68] sm:$0xff]
          %v707 = vld [vmem:[%s3 + $0x70] sm:$0xff]
          %v708 = vld [vmem:[%s3 + $0x78] sm:$0xff]
          %v709 = vld [vmem:[%s4] sm:$0x1]
          %710 = vmatprep.subr.mxu0 0.0
          %711 = vmatpush1.msra.mxu0 %v708
          %712 = vmatprep.subr.mxu0 0.0
          %713 = vmatpush1.msra.mxu0 %v707
          %714 = vmatprep.subr.mxu0 0.0
          %715 = vmatpush1.msra.mxu0 %v706
          %716 = vmatprep.subr.mxu0 0.0
          %717 = vmatpush1.msra.mxu0 %v705
          %718 = vmatprep.subr.mxu0 0.0
          %719 = vmatpush1.msra.mxu0 %v704
          %720 = vmatprep.subr.mxu0 0.0
          %721 = vmatpush1.msra.mxu0 %v703
          %722 = vmatprep.subr.mxu0 0.0
          %723 = vmatpush1.msra.mxu0 %v702
          %724 = vmatprep.subr.mxu0 0.0
          %725 = vmatpush1.msra.mxu0 %v701
          %726 = vmatprep.subr.mxu0 0.0
          %727 = vmatpush1.msra.mxu0 %v700
          %728 = vmatprep.subr.mxu0 0.0
          %729 = vmatpush1.msra.mxu0 %v699
          %730 = vmatprep.subr.mxu0 0.0
          %731 = vmatpush1.msra.mxu0 %v698
          %732 = vmatprep.subr.mxu0 0.0
          %733 = vmatpush1.msra.mxu0 %v697
          %734 = vmatprep.subr.mxu0 0.0
          %735 = vmatpush1.msra.mxu0 %v696
          %736 = vmatprep.subr.mxu0 0.0
          %737 = vmatpush1.msra.mxu0 %v695
          %738 = vmatprep.subr.mxu0 0.0
          %739 = vmatpush1.msra.mxu0 %v694
          %740 = vmatprep.subr.mxu0 0.0
          %741 = vmatpush1.msra.mxu0 %v693
          %742 = vmatprep.subr.mxu0 0.0
          %743 = vmatpush2.msra.mxu0 0.0
          %744 = vmatprep.subr.mxu0 0.0
          %745 = vmatpush2.msra.mxu0 0.0
          %746 = vmatprep.subr.mxu0 0.0
          %747 = vmatpush2.msra.mxu0 0.0
          %748 = vmatprep.subr.mxu0 0.0
          %749 = vmatpush2.msra.mxu0 0.0
          %750 = vmatprep.subr.mxu0 0.0
          %751 = vmatpush2.msra.mxu0 0.0
          %752 = vmatprep.subr.mxu0 0.0
          %753 = vmatpush2.msra.mxu0 0.0
          %754 = vmatprep.subr.mxu0 0.0
          %755 = vmatpush2.msra.mxu0 0.0
          %756 = vmatprep.subr.mxu0 0.0
          %757 = vmatpush2.msra.mxu0 0.0
          %758 = vmatprep.subr.mxu0 0.0
          %759 = vmatpush2.msra.mxu0 0.0
          %760 = vmatprep.subr.mxu0 0.0
          %761 = vmatpush2.msra.mxu0 0.0
          %762 = vmatprep.subr.mxu0 0.0
          %763 = vmatpush2.msra.mxu0 0.0
          %764 = vmatprep.subr.mxu0 0.0
          %765 = vmatpush2.msra.mxu0 0.0
          %766 = vmatprep.subr.mxu0 0.0
          %767 = vmatpush2.msra.mxu0 0.0
          %768 = vmatprep.subr.mxu0 0.0
          %769 = vmatpush2.msra.mxu0 0.0
          %770 = vmatprep.subr.mxu0 0.0
          %771 = vmatpush2.msra.mxu0 0.0
          %772 = vmatprep.subr.mxu0 0.0
          %773 = vmatpush2.msra.mxu0 0.0
          %774 = vmatprep.mubr.f32.mxu0 0.0
          %775 = vmatmul.mubr.f32.gmra.mxu0 %v692
          %v776 = vpop.f32.mrf.mxu0
          %v777 = vadd.f32 %v709, %v776
          %v778 = vpop.f32.mrf.mxu0
          %779 = vdwg.mxu0
          %780 = vst [vmem:[%s239] sm:$0x1] %v777
        $region48: #{traced_wrapper_forward.1} parent=39 // pred_fallthru
          _
        %s781 = sand.u32 %s151, 1
        %s782 = scalar_lea.sflag [#allocation4], %s781
        %s783 = sand.u32 %s151, 1
        %s784 = scalar_lea.vmem [#allocation3], %s783
        // Predicated region
        $region49: #{traced_wrapper_forward.1} parent=39 // pred_check
          %p785 = pneg %p161
        $region50: #{traced_wrapper_forward.1} parent=39 // pred_check_branch
          %787 = sbr.rel (%p785) target = $region52
        $region51: #{traced_wrapper_forward.1} parent=39 // pred_region
          %s789 = ssub.s32 16, 16
          %790 = vsyncadd %s782, %s789
          %s791 = smul.addr %s23, 16
          %s792 = scalar_lea.hbm %s5, %s791
          %s794 = sshll.u32 %s784, 4
          %s795 = int_to_ptr.vmem [resolvable:$true] %s794
          %797 = dma.vmem_to_hbm [thread:$0]  %s795, 16, %s792, %s782
        $region52: #{traced_wrapper_forward.1} parent=39 // pred_fallthru
          _
      $region40: #{traced_wrapper_forward.1} parent=5 // pred_fallthru
        _
      %p798 = scmp.le.s32.totalorder 2, %s14
      // Predicated region
      $region53: #{traced_wrapper_forward.1} parent=5 // pred_check
        %p799 = pneg %p798
      $region54: #{traced_wrapper_forward.1} parent=5 // pred_check_branch
        %801 = sbr.rel (%p799) target = $region56
      $region55: #{traced_wrapper_forward.1} parent=5 // pred_region
        %s802 = ssub.s32 %s14, 2
        // Predicated region
        $region57: #{traced_wrapper_forward.1} parent=55 // pred_check
          %p803 = pneg %p167
        $region58: #{traced_wrapper_forward.1} parent=55 // pred_check_branch
          %805 = sbr.rel (%p803) target = $region60
        $region59: #{traced_wrapper_forward.1} parent=55 // pred_region
          %s806 = sand.u32 %s152, 1
          %s807 = scalar_lea.sflag [#allocation4], %s806
          %s808 = sand.u32 %s152, 1
          %s809 = scalar_lea.vmem [#allocation3], %s808
          %810 = dma.done %s807, 16
        $region60: #{traced_wrapper_forward.1} parent=55 // pred_fallthru
          _
      $region56: #{traced_wrapper_forward.1} parent=5 // pred_fallthru
        _
    $region6: #{traced_wrapper_forward.1} parent=1 // loop_footer
      %s18 = sadd.s32 1, %s14
    $region7: #{traced_wrapper_forward.1} parent=1 // loop_footer_branch
      %13 = sbr.rel target = $region3
    $region8: #{traced_wrapper_forward.1} parent=1 // loop_exit
      _
    %811 = vsyncpa [#allocation4], 1
    %s812 = scalar_lea.sflag [#allocation4], 1
    %813 = vsyncpa %s812, 1

</llo_original>
